<compile_context>
chip_gen: v7x
topology: tpu7x:2x2x1
jax: 0.10.0
libtpu: 0.0.40
codegen_flags: <defaults>
</compile_context>

<pallas_src>
import functools

import jax
import jax.numpy as jnp
from jax.experimental import pallas as pl
from jax.experimental.pallas import tpu as pltpu


def _decomp_kernel(x_ref, res_ref, mean_ref, xpad_ref, *,
                   kernel_size, front_rep, end_rep, base, use_tree):
    # x_ref:    (Bt, L, Ct)               one (batch-tile, channel-tile) block
    # res_ref:  (Bt, L, Ct)               residual output block
    # mean_ref: (Bt, L, Ct)               moving-average output block
    # xpad_ref: (Bt, base + L + K - 1, Ct) scratch (x.dtype, edge-replicated seq)
    Bt, L, Ct = x_ref.shape
    Lp = L + kernel_size - 1
    x_start = base + front_rep

    x_raw = x_ref[...]                     # single block load, input dtype

    # Build the edge-replicated padded sequence entirely in VMEM.
    # NOTE: rows [0, base) of xpad_ref are alignment padding — never written,
    # never read; `base` puts x's first row on a pack-aligned sublane.
    xpad_ref[:, pl.ds(x_start, L), :] = x_raw
    if front_rep > 0:
        xpad_ref[:, pl.ds(base, front_rep), :] = jnp.broadcast_to(
            x_raw[:, 0:1, :], (Bt, front_rep, Ct))
    if end_rep > 0:
        xpad_ref[:, pl.ds(x_start + L, end_rep), :] = jnp.broadcast_to(
            x_raw[:, L - 1:L, :], (Bt, end_rep, Ct))

    if use_tree:
        # log2(K) shift-add tree: level l holds window sums of width 2^l.
        p0 = xpad_ref[:, pl.ds(base, Lp), :].astype(jnp.float32)
        levels = [p0]
        max_lvl = kernel_size.bit_length() - 1      # floor(log2(K))
        for lvl in range(1, max_lvl + 1):
            prev = levels[-1]
            step = 1 << (lvl - 1)
            n = prev.shape[1] - step
            levels.append(prev[:, :n, :] + prev[:, step:step + n, :])
        # Combine the binary decomposition of K into the full window sum.
        acc = None
        pos = 0
        for lvl in range(max_lvl, -1, -1):
            if kernel_size & (1 << lvl):
                piece = levels[lvl][:, pos:pos + L, :]
                acc = piece if acc is None else acc + piece
                pos += 1 << lvl
    else:
        # Small K: straight shifted-load sum, f32 accumulation on the VPU.
        acc = xpad_ref[:, pl.ds(base, L), :].astype(jnp.float32)
        for j in range(1, kernel_size):
            acc = acc + xpad_ref[:, pl.ds(base + j, L), :].astype(jnp.float32)

    mean = acc * (1.0 / kernel_size)
    xf = x_raw.astype(jnp.float32)
    mean_ref[...] = mean.astype(mean_ref.dtype)
    res_ref[...] = (xf - mean).astype(res_ref.dtype)


def _vmem_capacity_bytes():
    """Per-generation VMEM capacity; conservative (v7x, 64 MiB) fallback."""
    try:
        info = pltpu.get_tpu_info()
        cap = getattr(info, "vmem_capacity_bytes", None)
        if cap:
            return int(cap)
    except Exception:
        pass
    return 64 * 2**20


def _choose_tiles(B, L, C, itemsize, kernel_size):
    """Budget-driven (Bt, Ct) selection + derived vmem_limit_bytes."""
    K = kernel_size
    front_rep = K - 1 - (K - 1) // 2
    pack = {4: 8, 2: 16, 1: 32}.get(itemsize, 8)     # dtype-aware sublane pack
    base = (-front_rep) % pack
    Lp_s = base + L + K - 1

    cap = _vmem_capacity_bytes()
    budget = int(cap * 0.45)                         # per-step budget w/ headroom
    max_lvl = max(1, K.bit_length() - 1)

    def need(bt, ct):
        blocks = 2 * 3 * bt * L * ct * itemsize      # double-buffered 1 in + 2 out
        scratch = bt * Lp_s * ct * itemsize          # xpad scratch (x.dtype)
        temps = (2 + max_lvl) * bt * (L + K) * ct * 4  # f32 tree temporaries (bound)
        return blocks + scratch + temps

    # Channel tile: prefer full C; only tile (multiples of 128 dividing C) if forced.
    if C % 128 == 0:
        cands = sorted((d for d in range(128, C + 1, 128) if C % d == 0),
                       reverse=True)
        Ct = next((d for d in cands if need(1, d) <= budget), cands[-1])
    else:
        Ct = C   # (8,128) rule: non-multiple-of-128 last dim must be the full dim
    n_ct = C // Ct

    # Batch tile: largest divisor of B that fits the budget, keeps blocks in the
    # ~0.5-2 MiB sweet spot, and keeps >=2 grid steps for the 2nd v7x TensorCore.
    soft_block_cap = 2 * 2**20
    Bt = 1
    for d in sorted((d for d in range(1, B + 1) if B % d == 0), reverse=True):
        steps = (B // d) * n_ct
        if need(d, Ct) > budget:
            continue
        if steps < 2 and B * n_ct >= 2:
            continue
        if d > 1 and d * L * Ct * itemsize > soft_block_cap:
            continue
        Bt = d
        break

    need_bytes = need(Bt, Ct)
    vmem_limit = int(max(1.25 * need_bytes, 16 * 2**20))
    vmem_limit = min(vmem_limit, int(cap * 0.95))
    vmem_limit = max(vmem_limit, int(need_bytes))
    vmem_limit = min(vmem_limit, int(cap))
    return Bt, Ct, base, Lp_s, int(vmem_limit)


def series_decomp(x, kernel_size):
    """x: (B, L, C) -> (res, moving_mean), both (B, L, C)."""
    B, L, C = x.shape
    K = int(kernel_size)
    front_rep = K - 1 - (K - 1) // 2
    end_rep = (K - 1) // 2
    itemsize = jnp.dtype(x.dtype).itemsize

    Bt, Ct, base, Lp_s, vmem_limit = _choose_tiles(B, L, C, itemsize, K)
    n_b, n_ct = B // Bt, C // Ct
    use_tree = K > 8

    kernel = functools.partial(
        _decomp_kernel, kernel_size=K, front_rep=front_rep, end_rep=end_rep,
        base=base, use_tree=use_tree)

    cost = pl.CostEstimate(
        flops=B * L * C * (K + 2),
        transcendentals=0,
        bytes_accessed=3 * B * L * C * itemsize,   # 1 read + 2 writes
    )

    res, mean = pl.pallas_call(
        kernel,
        out_shape=(
            jax.ShapeDtypeStruct((B, L, C), x.dtype),
            jax.ShapeDtypeStruct((B, L, C), x.dtype),
        ),
        grid_spec=pltpu.PrefetchScalarGridSpec(
            num_scalar_prefetch=0,
            grid=(n_b, n_ct),
            in_specs=[
                pl.BlockSpec((Bt, L, Ct), lambda b, c: (b, 0, c)),
            ],
            out_specs=[
                pl.BlockSpec((Bt, L, Ct), lambda b, c: (b, 0, c)),
                pl.BlockSpec((Bt, L, Ct), lambda b, c: (b, 0, c)),
            ],
            scratch_shapes=[pltpu.VMEM((Bt, Lp_s, Ct), x.dtype)],
        ),
        compiler_params=pltpu.CompilerParams(
            dimension_semantics=("parallel", "parallel"),
            vmem_limit_bytes=vmem_limit,
        ),
        cost_estimate=cost,
    )(x)
    return res, mean


def _reference(x, kernel_size):
    """Pure-JAX reference mirroring the PyTorch module exactly (f32 math)."""
    B, L, C = x.shape
    front_rep = kernel_size - 1 - (kernel_size - 1) // 2
    end_rep = (kernel_size - 1) // 2
    xf = x.astype(jnp.float32)
    front = jnp.broadcast_to(xf[:, 0:1, :], (B, front_rep, C))
    end = jnp.broadcast_to(xf[:, -1:, :], (B, end_rep, C))
    xp = jnp.concatenate([front, xf, end], axis=1)
    windows = jnp.stack([xp[:, j:j + L, :] for j in range(kernel_size)], axis=0)
    mean = jnp.mean(windows, axis=0)
    return (xf - mean).astype(x.dtype), mean.astype(x.dtype)


def _check(x, kernel_size, atol=1e-5, rtol=1e-5):
    res, mean = series_decomp(x, kernel_size)
    jax.block_until_ready((res, mean))
    res_ref, mean_ref = _reference(x, kernel_size)
    assert res.shape == x.shape and mean.shape == x.shape
    assert jnp.allclose(res, res_ref, atol=atol, rtol=rtol)
    assert jnp.allclose(mean, mean_ref, atol=atol, rtol=rtol)


if __name__ == "__main__":
    key = jax.random.PRNGKey(0)
    k1, k2, k3, k4 = jax.random.split(key, 4)

    # Small-channel Autoformer-like case (full-C block, 2-step grid).
    x1 = jax.random.normal(k1, (2, 24, 8), dtype=jnp.float32)
    _check(x1, kernel_size=5)

    # Wide-channel case: full-C (1024) preferred, grid = (2, 1).
    x2 = jax.random.normal(k2, (2, 16, 1024), dtype=jnp.float32)
    _check(x2, kernel_size=5)

    # Typical Autoformer K = 25 -> log2(K) tree-sum path.
    x3 = jax.random.normal(k3, (1, 96, 8), dtype=jnp.float32)
    _check(x3, kernel_size=25)

    # Batch-fused case: Bt > 1 (B=8 -> Bt=4, grid=(2,1)).
    x4 = jax.random.normal(k4, (8, 32, 128), dtype=jnp.float32)
    _check(x4, kernel_size=7)

    print("KERNEL_OK")
</pallas_src>

<mosaic_0001>
module attributes {stable_mosaic.version = 11 : i64} {
  func.func @_decomp_kernel(%arg0: i32, %arg1: i32, %arg2: memref<1x24x8xf32, #tpu.memory_space<vmem>>, %arg3: memref<1x24x8xf32, #tpu.memory_space<vmem>>, %arg4: memref<1x24x8xf32, #tpu.memory_space<vmem>>, %arg5: memref<1x34x8xf32, #tpu.memory_space<vmem>>) attributes {dimension_semantics = [#tpu.dimension_semantics<parallel>, #tpu.dimension_semantics<parallel>], iteration_bounds = array<i64: 2, 1>, scalar_prefetch = 0 : i64, scratch_operands = 1 : i64, tpu.core_type = #tpu.core_type<tc>, window_params = [{transform_indices = @transform_0, window_bounds = array<i64: 1, 24, 8>}, {transform_indices = @transform_1, window_bounds = array<i64: 1, 24, 8>}, {transform_indices = @transform_2, window_bounds = array<i64: 1, 24, 8>}]} {
    %c0 = arith.constant 0 : index
    %c0_0 = arith.constant 0 : index
    %c0_1 = arith.constant 0 : index
    %0 = vector.load %arg2[%c0, %c0_0, %c0_1] : memref<1x24x8xf32, #tpu.memory_space<vmem>>, vector<1x24x8xf32>
    %c0_2 = arith.constant 0 : index
    %c8 = arith.constant 8 : index
    %c0_3 = arith.constant 0 : index
    %1 = vector.load %arg5[%c0_2, %c8, %c0_3] : memref<1x34x8xf32, #tpu.memory_space<vmem>>, vector<1x24x8xf32>
    tpu.vector_store %arg5[%c0_2, %c8, %c0_3], %0 {strides = array<i32>} : memref<1x34x8xf32, #tpu.memory_space<vmem>>, vector<1x24x8xf32>,
    %2 = vector.extract_strided_slice %0 {offsets = [0, 0, 0], sizes = [1, 1, 8], strides = [1, 1, 1]} : vector<1x24x8xf32> to vector<1x1x8xf32>
    %3 = vector.shape_cast %2 : vector<1x1x8xf32> to vector<1x1x8xf32>
    %4 = vector.broadcast %3 : vector<1x1x8xf32> to vector<1x2x8xf32>
    %c0_4 = arith.constant 0 : index
    %c6 = arith.constant 6 : index
    %c0_5 = arith.constant 0 : index
    %5 = vector.load %arg5[%c0_4, %c6, %c0_5] : memref<1x34x8xf32, #tpu.memory_space<vmem>>, vector<1x2x8xf32>
    tpu.vector_store %arg5[%c0_4, %c6, %c0_5], %4 {strides = array<i32>} : memref<1x34x8xf32, #tpu.memory_space<vmem>>, vector<1x2x8xf32>,
    %6 = vector.extract_strided_slice %0 {offsets = [0, 23, 0], sizes = [1, 1, 8], strides = [1, 1, 1]} : vector<1x24x8xf32> to vector<1x1x8xf32>
    %7 = vector.shape_cast %6 : vector<1x1x8xf32> to vector<1x1x8xf32>
    %8 = vector.broadcast %7 : vector<1x1x8xf32> to vector<1x2x8xf32>
    %c0_6 = arith.constant 0 : index
    %c32 = arith.constant 32 : index
    %c0_7 = arith.constant 0 : index
    %9 = vector.load %arg5[%c0_6, %c32, %c0_7] : memref<1x34x8xf32, #tpu.memory_space<vmem>>, vector<1x2x8xf32>
    tpu.vector_store %arg5[%c0_6, %c32, %c0_7], %8 {strides = array<i32>} : memref<1x34x8xf32, #tpu.memory_space<vmem>>, vector<1x2x8xf32>,
    %c0_8 = arith.constant 0 : index
    %c6_9 = arith.constant 6 : index
    %c0_10 = arith.constant 0 : index
    %10 = vector.load %arg5[%c0_8, %c6_9, %c0_10] : memref<1x34x8xf32, #tpu.memory_space<vmem>>, vector<1x24x8xf32>
    %c0_11 = arith.constant 0 : index
    %c7 = arith.constant 7 : index
    %c0_12 = arith.constant 0 : index
    %11 = vector.load %arg5[%c0_11, %c7, %c0_12] : memref<1x34x8xf32, #tpu.memory_space<vmem>>, vector<1x24x8xf32>
    %12 = arith.addf %10, %11 : vector<1x24x8xf32>
    %c0_13 = arith.constant 0 : index
    %c8_14 = arith.constant 8 : index
    %c0_15 = arith.constant 0 : index
    %13 = vector.load %arg5[%c0_13, %c8_14, %c0_15] : memref<1x34x8xf32, #tpu.memory_space<vmem>>, vector<1x24x8xf32>
    %14 = arith.addf %12, %13 : vector<1x24x8xf32>
    %c0_16 = arith.constant 0 : index
    %c9 = arith.constant 9 : index
    %c0_17 = arith.constant 0 : index
    %15 = vector.load %arg5[%c0_16, %c9, %c0_17] : memref<1x34x8xf32, #tpu.memory_space<vmem>>, vector<1x24x8xf32>
    %16 = arith.addf %14, %15 : vector<1x24x8xf32>
    %c0_18 = arith.constant 0 : index
    %c10 = arith.constant 10 : index
    %c0_19 = arith.constant 0 : index
    %17 = vector.load %arg5[%c0_18, %c10, %c0_19] : memref<1x34x8xf32, #tpu.memory_space<vmem>>, vector<1x24x8xf32>
    %18 = arith.addf %16, %17 : vector<1x24x8xf32>
    %cst = arith.constant 2.000000e-01 : f32
    %19 = vector.broadcast %cst : f32 to vector<1x24x8xf32>
    %20 = arith.mulf %18, %19 : vector<1x24x8xf32>
    %c0_20 = arith.constant 0 : index
    %c0_21 = arith.constant 0 : index
    %c0_22 = arith.constant 0 : index
    %21 = vector.load %arg4[%c0_20, %c0_21, %c0_22] : memref<1x24x8xf32, #tpu.memory_space<vmem>>, vector<1x24x8xf32>
    tpu.vector_store %arg4[%c0_20, %c0_21, %c0_22], %20 {strides = array<i32>} : memref<1x24x8xf32, #tpu.memory_space<vmem>>, vector<1x24x8xf32>,
    %22 = arith.subf %0, %20 : vector<1x24x8xf32>
    %c0_23 = arith.constant 0 : index
    %c0_24 = arith.constant 0 : index
    %c0_25 = arith.constant 0 : index
    %23 = vector.load %arg3[%c0_23, %c0_24, %c0_25] : memref<1x24x8xf32, #tpu.memory_space<vmem>>, vector<1x24x8xf32>
    tpu.vector_store %arg3[%c0_23, %c0_24, %c0_25], %22 {strides = array<i32>} : memref<1x24x8xf32, #tpu.memory_space<vmem>>, vector<1x24x8xf32>,
    return
  }
  func.func @transform_0(%arg0: i32, %arg1: i32) -> (i32, i32, i32) {
    %c0_i32 = arith.constant 0 : i32
    %c0_i32_0 = arith.constant 0 : i32
    return %arg0, %c0_i32, %arg1 : i32, i32, i32
  }
  func.func @transform_1(%arg0: i32, %arg1: i32) -> (i32, i32, i32) {
    %c0_i32 = arith.constant 0 : i32
    %c0_i32_0 = arith.constant 0 : i32
    return %arg0, %c0_i32, %arg1 : i32, i32, i32
  }
  func.func @transform_2(%arg0: i32, %arg1: i32) -> (i32, i32, i32) {
    %c0_i32 = arith.constant 0 : i32
    %c0_i32_0 = arith.constant 0 : i32
    return %arg0, %c0_i32, %arg1 : i32, i32, i32
  }
}

</mosaic_0001>

<llo_original>
// kernel: tpu_custom_call.1
$region0: #{tpu_custom_call.1}
  #allocation0 [shape = 'u32[]', space=smem, size = 0x4, offset = 0x4, fixed_abs, tag = 'smem constant byte address 0x4 - core index']
  #allocation1 [shape = 'u32[144,128]{1,0:T(1,128)}', space=vmem, size = 0x12000, scoped, tag = 'internal scratch']
  #allocation2 [shape = 'f32[1,34,8]{2,1,0:T(8,128)}', space=vmem, size = 0x5000, scoped, tag = 'scratch operand']
  %s0 = inlined_call_operand.vmem [shape: f32[2,24,8], index: 0, kind: input, shape index: {}]
  %s1 = inlined_call_operand.vmem [shape: f32[2,24,8], index: 1, kind: output, shape index: {0}]
  %s2 = inlined_call_operand.vmem [shape: f32[2,24,8], index: 2, kind: output, shape index: {1}]
  %3 = xla_tuple %s1, %s2
  %s4 = sld [smem:[#allocation0]]
  $region45: #{tpu_custom_call.1} parent=0
    _
  %s6 = ssub.s32 1, %s4
  %s7 = scalar_select 0, %s6, %s4
  loop: start=0, step=1, limit=4
  $region2: #{tpu_custom_call.1} parent=0 // loop_pre_header
    _
  $region3: #{tpu_custom_call.1} parent=0 // loop_header
    %s9 = sphi 0, %s13
    %p10 = scmp.ge.s32.totalorder %s9, 4
    %s16 = sphi 0, %s28
    %s17 = sphi 0, %s24
    %s18 = sphi 0, %s16
    %s19 = sphi 0, %s17
    %s20 = sphi 0, %s18
    %s21 = sphi 0, %s19
    %s33 = sphi 0, %s35
    %s36 = sphi 0, %s33
    %s37 = sphi 0, %s36
    %s53 = sphi 0, %s37
    %s61 = sphi 0, %s63
    %s64 = sphi 0, %s61
    %s65 = sphi 0, %s64
    %s81 = sphi 0, %s65
    %s89 = sphi 0, %s91
    %s92 = sphi 0, %s89
    %s93 = sphi 0, %s92
    %s109 = sphi 0, %s93
  $region4: #{tpu_custom_call.1} parent=0 // loop_header_branch
    %12 = sbr.rel (%p10) target = $region8
  $region5: #{tpu_custom_call.1} parent=0 // loop_body
    %s14 = ssub.s32 %s9, 1
    %s15 = ssub.s32 %s9, 2
    %s22 = sadd.s32 1, %s17
    %p23 = scmp.ge.s32.totalorder %s22, 1
    %s24 = scalar_select %p23, 0, %s22
    %s25 = sadd.s32 1, %s16
    %s26 = scalar_select %p23, %s25, %s16
    %p27 = scmp.ge.s32.totalorder %s26, 2
    %s28 = scalar_select %p27, 0, %s26
    %s29 = ssub.s32 %s16, %s28
    %s30 = ssub.s32 %s17, %s24
    %s31 = sor.u32 %s29, %s30
    %p32 = scmp.eq.s32.totalorder %s31, 0
    %s34 = sadd.s32 %s33, 1
    %s35 = scalar_select %p32, %s33, %s34
    %p38 = pneg %p32
    %p39 = scmp.eq.s32.totalorder %s9, 1
    %p40 = por %p38, %p39
    %p41 = scmp.ne.s32.totalorder %s33, %s36
    %p42 = scmp.eq.s32.totalorder %s9, 0
    %p43 = por %p41, %p42
    %p44 = scmp.ne.s32.totalorder %s33, %s36
    %p45 = scmp.eq.s32.totalorder %s14, 1
    %p46 = por %p44, %p45
    %p47 = scmp.ne.s32.totalorder %s36, %s37
    %p48 = scmp.eq.s32.totalorder %s14, 0
    %p49 = por %p47, %p48
    %p50 = scmp.ne.s32.totalorder %s36, %s37
    %p51 = scmp.eq.s32.totalorder %s15, 1
    %p52 = por %p50, %p51
    %p54 = scmp.ne.s32.totalorder %s37, %s53
    %p55 = scmp.eq.s32.totalorder %s15, 0
    %p56 = por %p54, %p55
    %s57 = ssub.s32 %s16, %s28
    %s58 = ssub.s32 %s17, %s24
    %s59 = sor.u32 %s57, %s58
    %p60 = scmp.eq.s32.totalorder %s59, 0
    %s62 = sadd.s32 %s61, 1
    %s63 = scalar_select %p60, %s61, %s62
    %p66 = pneg %p60
    %p67 = scmp.eq.s32.totalorder %s9, 1
    %p68 = por %p66, %p67
    %p69 = scmp.ne.s32.totalorder %s61, %s64
    %p70 = scmp.eq.s32.totalorder %s9, 0
    %p71 = por %p69, %p70
    %p72 = scmp.ne.s32.totalorder %s61, %s64
    %p73 = scmp.eq.s32.totalorder %s14, 1
    %p74 = por %p72, %p73
    %p75 = scmp.ne.s32.totalorder %s64, %s65
    %p76 = scmp.eq.s32.totalorder %s14, 0
    %p77 = por %p75, %p76
    %p78 = scmp.ne.s32.totalorder %s64, %s65
    %p79 = scmp.eq.s32.totalorder %s15, 1
    %p80 = por %p78, %p79
    %p82 = scmp.ne.s32.totalorder %s65, %s81
    %p83 = scmp.eq.s32.totalorder %s15, 0
    %p84 = por %p82, %p83
    %s85 = ssub.s32 %s16, %s28
    %s86 = ssub.s32 %s17, %s24
    %s87 = sor.u32 %s85, %s86
    %p88 = scmp.eq.s32.totalorder %s87, 0
    %s90 = sadd.s32 %s89, 1
    %s91 = scalar_select %p88, %s89, %s90
    %p94 = pneg %p88
    %p95 = scmp.eq.s32.totalorder %s9, 1
    %p96 = por %p94, %p95
    %p97 = scmp.ne.s32.totalorder %s89, %s92
    %p98 = scmp.eq.s32.totalorder %s9, 0
    %p99 = por %p97, %p98
    %p100 = scmp.ne.s32.totalorder %s89, %s92
    %p101 = scmp.eq.s32.totalorder %s14, 1
    %p102 = por %p100, %p101
    %p103 = scmp.ne.s32.totalorder %s92, %s93
    %p104 = scmp.eq.s32.totalorder %s14, 0
    %p105 = por %p103, %p104
    %p106 = scmp.ne.s32.totalorder %s92, %s93
    %p107 = scmp.eq.s32.totalorder %s15, 1
    %p108 = por %p106, %p107
    %p110 = scmp.ne.s32.totalorder %s93, %s109
    %p111 = scmp.eq.s32.totalorder %s15, 0
    %p112 = por %p110, %p111
    %p113 = scmp.le.s32.totalorder 1, %s9
    %p114 = scmp.lt.s32.totalorder %s9, 3
    %p115 = pnand %p113, %p114
    %p116 = pneg %p115
    // Predicated region
    $region9: #{tpu_custom_call.1} parent=5 // pred_check
      _
    $region10: #{tpu_custom_call.1} parent=5 // pred_check_branch
      %118 = sbr.rel (%p115) target = $region12
    $region11: #{tpu_custom_call.1} parent=5 // pred_region
      %s119 = ssub.s32 %s9, 1
    $region12: #{tpu_custom_call.1} parent=5 // pred_fallthru
      _
    %p120 = scmp.lt.s32.totalorder %s9, 2
    // Predicated region
    $region13: #{tpu_custom_call.1} parent=5 // pred_check
      %p121 = pneg %p120
    $region14: #{tpu_custom_call.1} parent=5 // pred_check_branch
      %123 = sbr.rel (%p121) target = $region16
    $region15: #{tpu_custom_call.1} parent=5 // pred_region
      // Predicated region
      $region17: #{tpu_custom_call.1} parent=15 // pred_check
        %p124 = pneg %p43
      $region18: #{tpu_custom_call.1} parent=15 // pred_check_branch
        %126 = sbr.rel (%p124) target = $region20
      $region19: #{tpu_custom_call.1} parent=15 // pred_region
        %p127 = scmp.lt.s32.totalorder %s16, 1
        %s128 = scalar_select %p127, %s16, 1
        %p129 = scmp.lt.s32.totalorder %s17, 0
        %s130 = scalar_select %p129, %s17, 0
        %s131 = smul.addr %s128, 3
        %s132 = sadd.s32 %s130, %s131
        %s133 = smul.addr %s132, 8
        %s134 = scalar_lea.vmem %s0, %s133
      $region20: #{tpu_custom_call.1} parent=15 // pred_fallthru
        _
    $region16: #{tpu_custom_call.1} parent=5 // pred_fallthru
      _
    %p135 = scmp.le.s32.totalorder 1, %s9
    %p136 = scmp.lt.s32.totalorder %s9, 3
    %p137 = pnand %p135, %p136
    %p138 = pneg %p137
    // Predicated region
    $region21: #{tpu_custom_call.1} parent=5 // pred_check
      _
    $region22: #{tpu_custom_call.1} parent=5 // pred_check_branch
      %140 = sbr.rel (%p137) target = $region24
    $region23: #{tpu_custom_call.1} parent=5 // pred_region
      %s141 = ssub.s32 %s9, 1
      %p142 = scmp.lt.s32.totalorder %s18, 1
      %s143 = scalar_select %p142, %s18, 1
      %p144 = scmp.lt.s32.totalorder %s19, 0
      %s145 = scalar_select %p144, %s19, 0
      %s146 = smul.addr %s143, 3
      %s147 = sadd.s32 %s145, %s146
      %s148 = smul.addr %s147, 8
      %s149 = scalar_lea.vmem %s0, %s148
      %p150 = pneg %p49
      %p151 = pneg %p46
      %p152 = pneg %p77
      %p153 = pneg %p74
      %p154 = scmp.lt.s32.totalorder %s18, 1
      %s155 = scalar_select %p154, %s18, 1
      %p156 = scmp.lt.s32.totalorder %s19, 0
      %s157 = scalar_select %p156, %s19, 0
      %s158 = smul.addr %s155, 3
      %s159 = sadd.s32 %s157, %s158
      %s160 = smul.addr %s159, 8
      %s161 = scalar_lea.vmem %s1, %s160
      %p162 = pneg %p105
      %p163 = pneg %p102
      %p164 = scmp.lt.s32.totalorder %s18, 1
      %s165 = scalar_select %p164, %s18, 1
      %p166 = scmp.lt.s32.totalorder %s19, 0
      %s167 = scalar_select %p166, %s19, 0
      %s168 = smul.addr %s165, 3
      %s169 = sadd.s32 %s167, %s168
      %s170 = smul.addr %s169, 8
      %s171 = scalar_lea.vmem %s2, %s170
      %p172 = scmp.lt.s32.totalorder %s18, 1
      %s173 = scalar_select %p172, %s18, 1
      %p174 = scmp.lt.s32.totalorder %s19, 0
      %s175 = scalar_select %p174, %s19, 0
      %s176 = smul.addr %s173, 3
      %s177 = sadd.s32 %s175, %s176
      %s178 = smul.addr %s177, 8
      %s179 = scalar_lea.vmem %s0, %s178
      %p180 = scmp.lt.s32.totalorder %s18, 1
      %s181 = scalar_select %p180, %s18, 1
      %p182 = scmp.lt.s32.totalorder %s19, 0
      %s183 = scalar_select %p182, %s19, 0
      %s184 = smul.addr %s181, 3
      %s185 = sadd.s32 %s183, %s184
      %s186 = smul.addr %s185, 8
      %s187 = scalar_lea.vmem %s1, %s186
      %p188 = scmp.lt.s32.totalorder %s18, 1
      %s189 = scalar_select %p188, %s18, 1
      %p190 = scmp.lt.s32.totalorder %s19, 0
      %s191 = scalar_select %p190, %s19, 0
      %s192 = smul.addr %s189, 3
      %s193 = sadd.s32 %s191, %s192
      %s194 = smul.addr %s193, 8
      %s195 = scalar_lea.vmem %s2, %s194
      %v196 = vld [vmem:[%s179] sm:$0xff]
      %v197 = vld [vmem:[%s179 + $0x8] sm:$0xff]
      %v198 = vld [vmem:[%s179 + $0x10] sm:$0xff]
      %vm199 = vcmask 64512
      %200 = vst.msk [vmem:[#allocation2 + $0x8] sm:$0xff] %vm199, %v196
      %201 = vst.msk [vmem:[#allocation2 + $0x10] sm:$0xff] %vm199, %v197
      %202 = vst.msk [vmem:[#allocation2 + $0x18] sm:$0xff] %vm199, %v198
      %v203 = vlaneseq
      %v204 = vshrl.u32 %v203, 7
      %v205 = vsub.s32 0, %v204
      %v206 = vrot.slane %v196, %v205
      %vm207 = vcmask 58368
      %208 = vst.msk [vmem:[#allocation2 + $0x6] sm:$0x3] %vm207, %v206
      %v209 = vlaneseq
      %v210 = vshrl.u32 %v209, 7
      %v211 = vsub.s32 7, %v210
      %v212 = vrot.slane %v198, %v211
      %213 = vst.msk [vmem:[#allocation2 + $0x20] sm:$0x3] %vm207, %v212
      %v214 = vld [vmem:[#allocation2 + $0x6] sm:$0xff]
      %v215 = vld [vmem:[#allocation2 + $0xe] sm:$0xff]
      %v216 = vld [vmem:[#allocation2 + $0x16] sm:$0xff]
      %v217 = vld [vmem:[#allocation2 + $0x7] sm:$0xff]
      %v218 = vld [vmem:[#allocation2 + $0xf] sm:$0xff]
      %v219 = vld [vmem:[#allocation2 + $0x17] sm:$0xff]
      %v220 = vadd.f32 %v214, %v217
      %v221 = vadd.f32 %v215, %v218
      %v222 = vadd.f32 %v216, %v219
      %v223 = vld [vmem:[#allocation2 + $0x8] sm:$0xff]
      %v224 = vld [vmem:[#allocation2 + $0x10] sm:$0xff]
      %v225 = vld [vmem:[#allocation2 + $0x18] sm:$0xff]
      %v226 = vadd.f32 %v220, %v223
      %v227 = vadd.f32 %v221, %v224
      %v228 = vadd.f32 %v222, %v225
      %v229 = vld [vmem:[#allocation2 + $0x9] sm:$0xff]
      %v230 = vld [vmem:[#allocation2 + $0x11] sm:$0xff]
      %v231 = vld [vmem:[#allocation2 + $0x19] sm:$0xff]
      %v232 = vadd.f32 %v226, %v229
      %v233 = vadd.f32 %v227, %v230
      %v234 = vadd.f32 %v228, %v231
      %v235 = vld [vmem:[#allocation2 + $0xa] sm:$0xff]
      %v236 = vld [vmem:[#allocation2 + $0x12] sm:$0xff]
      %v237 = vld [vmem:[#allocation2 + $0x1a] sm:$0xff]
      %v238 = vadd.f32 %v232, %v235
      %v239 = vadd.f32 %v233, %v236
      %v240 = vadd.f32 %v234, %v237
      %v241 = vmul.f32 %v238, 0.2
      %v242 = vmul.f32 %v239, 0.2
      %v243 = vmul.f32 %v240, 0.2
      %244 = vst.msk [vmem:[%s195] sm:$0xff] %vm199, %v241
      %245 = vst.msk [vmem:[%s195 + $0x8] sm:$0xff] %vm199, %v242
      %246 = vst.msk [vmem:[%s195 + $0x10] sm:$0xff] %vm199, %v243
      %v247 = vsub.f32 %v196, %v241
      %v248 = vsub.f32 %v197, %v242
      %v249 = vsub.f32 %v198, %v243
      %250 = vst.msk [vmem:[%s187] sm:$0xff] %vm199, %v247
      %251 = vst.msk [vmem:[%s187 + $0x8] sm:$0xff] %vm199, %v248
      %252 = vst.msk [vmem:[%s187 + $0x10] sm:$0xff] %vm199, %v249
      %p253 = scmp.lt.s32.totalorder %s18, 1
      %s254 = scalar_select %p253, %s18, 1
      %p255 = scmp.lt.s32.totalorder %s19, 0
      %s256 = scalar_select %p255, %s19, 0
      %s257 = smul.addr %s254, 3
      %s258 = sadd.s32 %s256, %s257
      %s259 = smul.addr %s258, 8
      %s260 = scalar_lea.vmem %s1, %s259
      %p261 = scmp.lt.s32.totalorder %s18, 1
      %s262 = scalar_select %p261, %s18, 1
      %p263 = scmp.lt.s32.totalorder %s19, 0
      %s264 = scalar_select %p263, %s19, 0
      %s265 = smul.addr %s262, 3
      %s266 = sadd.s32 %s264, %s265
      %s267 = smul.addr %s266, 8
      %s268 = scalar_lea.vmem %s2, %s267
      // Predicated region
      $region25: #{tpu_custom_call.1} parent=23 // pred_check
        %p269 = pneg %p74
      $region26: #{tpu_custom_call.1} parent=23 // pred_check_branch
        %271 = sbr.rel (%p269) target = $region28
      $region27: #{tpu_custom_call.1} parent=23 // pred_region
        _
      $region28: #{tpu_custom_call.1} parent=23 // pred_fallthru
        _
      // Predicated region
      $region29: #{tpu_custom_call.1} parent=23 // pred_check
        %p272 = pneg %p102
      $region30: #{tpu_custom_call.1} parent=23 // pred_check_branch
        %274 = sbr.rel (%p272) target = $region32
      $region31: #{tpu_custom_call.1} parent=23 // pred_region
        _
      $region32: #{tpu_custom_call.1} parent=23 // pred_fallthru
        _
    $region24: #{tpu_custom_call.1} parent=5 // pred_fallthru
      _
    %p275 = scmp.le.s32.totalorder 2, %s9
    // Predicated region
    $region33: #{tpu_custom_call.1} parent=5 // pred_check
      %p276 = pneg %p275
    $region34: #{tpu_custom_call.1} parent=5 // pred_check_branch
      %278 = sbr.rel (%p276) target = $region36
    $region35: #{tpu_custom_call.1} parent=5 // pred_region
      %s279 = ssub.s32 %s9, 2
      // Predicated region
      $region37: #{tpu_custom_call.1} parent=35 // pred_check
        %p280 = pneg %p80
      $region38: #{tpu_custom_call.1} parent=35 // pred_check_branch
        %282 = sbr.rel (%p280) target = $region40
      $region39: #{tpu_custom_call.1} parent=35 // pred_region
        %p283 = scmp.lt.s32.totalorder %s20, 1
        %s284 = scalar_select %p283, %s20, 1
        %p285 = scmp.lt.s32.totalorder %s21, 0
        %s286 = scalar_select %p285, %s21, 0
        %s287 = smul.addr %s284, 3
        %s288 = sadd.s32 %s286, %s287
        %s289 = smul.addr %s288, 8
        %s290 = scalar_lea.vmem %s1, %s289
      $region40: #{tpu_custom_call.1} parent=35 // pred_fallthru
        _
      // Predicated region
      $region41: #{tpu_custom_call.1} parent=35 // pred_check
        %p291 = pneg %p108
      $region42: #{tpu_custom_call.1} parent=35 // pred_check_branch
        %293 = sbr.rel (%p291) target = $region44
      $region43: #{tpu_custom_call.1} parent=35 // pred_region
        %p294 = scmp.lt.s32.totalorder %s20, 1
        %s295 = scalar_select %p294, %s20, 1
        %p296 = scmp.lt.s32.totalorder %s21, 0
        %s297 = scalar_select %p296, %s21, 0
        %s298 = smul.addr %s295, 3
        %s299 = sadd.s32 %s297, %s298
        %s300 = smul.addr %s299, 8
        %s301 = scalar_lea.vmem %s2, %s300
      $region44: #{tpu_custom_call.1} parent=35 // pred_fallthru
        _
    $region36: #{tpu_custom_call.1} parent=5 // pred_fallthru
      _
  $region6: #{tpu_custom_call.1} parent=0 // loop_footer
    %s13 = sadd.s32 1, %s9
  $region7: #{tpu_custom_call.1} parent=0 // loop_footer_branch
    %8 = sbr.rel target = $region3
  $region8: #{tpu_custom_call.1} parent=0 // loop_exit
    _

</llo_original>
